<compile_context>
chip_gen: v5e
topology: v5e:2x2
jax: 0.10.0
libtpu: 0.0.40
codegen_flags: <defaults>
</compile_context>

<pallas_src>
import functools

import numpy as np

import jax
import jax.numpy as jnp
from jax.experimental import pallas as pl
from jax.experimental.pallas import tpu as pltpu

_EPS = 1e-6                      # nn.LayerNorm(..., eps=1e-06) in the module
_VMEM_LIMIT = 64 * 1024 * 1024   # explicit scoped-VMEM budget (fits v5e/v6e/v7x)


# ----------------------------------------------------------------------------
# small helpers
# ----------------------------------------------------------------------------
def _layer_norm(x, gamma, beta, eps=_EPS):
    # PyTorch nn.LayerNorm: biased variance over the last dim. f32 math.
    mean = jnp.mean(x, axis=-1, keepdims=True)
    var = jnp.mean((x - mean) ** 2, axis=-1, keepdims=True)
    return (x - mean) * jax.lax.rsqrt(var + eps) * gamma + beta


def _pick_tile(n, candidates=(512, 256, 128, 64, 32, 16, 8)):
    """Largest tile from `candidates` that evenly divides n (else n itself)."""
    for t in candidates:
        if t <= n and n % t == 0:
            return t
    return n


def _probe_kernel(x_ref, o_ref):
    o_ref[...] = x_ref[...]


@functools.lru_cache(maxsize=None)
def _weight_pipeline_mode():
    """Return pl.Buffered(1) if single-buffered (constant-index) operands are
    supported by this Pallas install, else None (default double-buffering)."""
    buffered = getattr(pl, "Buffered", None)
    if buffered is None:
        return None
    try:
        mode = buffered(1)
        fn = pl.pallas_call(
            _probe_kernel,
            out_shape=jax.ShapeDtypeStruct((8, 128), jnp.float32),
            grid=(1,),
            in_specs=[pl.BlockSpec((8, 128), lambda i: (0, 0), pipeline_mode=mode)],
            out_specs=pl.BlockSpec((8, 128), lambda i: (0, 0)),
        )
        jax.block_until_ready(fn(jnp.zeros((8, 128), jnp.float32)))
        return mode
    except Exception:
        return None


def _const_spec(shape):
    """BlockSpec for a weight: full array, constant block index, single-buffered
    when supported (its block never changes across the grid)."""
    nd = len(shape)
    index_map = lambda *_: (0,) * nd
    mode = _weight_pipeline_mode()
    if mode is not None:
        return pl.BlockSpec(shape, index_map, pipeline_mode=mode)
    return pl.BlockSpec(shape, index_map)


def _compiler_params(semantics):
    return pltpu.CompilerParams(dimension_semantics=semantics,
                                vmem_limit_bytes=_VMEM_LIMIT)


# ----------------------------------------------------------------------------
# kernels
# ----------------------------------------------------------------------------
def _prenorm_kernel(x_ref, pos_ref, g_ref, b_ref, o_ref, *, scale):
    # (optional scale_emb) + positional encoding + dropout(identity) + LayerNorm
    x = x_ref[0].astype(jnp.float32)                 # (TS, D)
    if scale != 1.0:
        x = x * scale
    x = x + pos_ref[...].astype(jnp.float32)
    o_ref[0] = _layer_norm(x, g_ref[...], b_ref[...]).astype(o_ref.dtype)


def _qkv_kernel(x_ref, wq_ref, wk_ref, wv_ref, q_ref, k_ref, v_ref):
    # Head-major projections: one batched einsum per Q/K/V, bf16 in / f32 acc.
    n_head = wq_ref.shape[0]
    xb = x_ref[0].astype(jnp.bfloat16)               # (TS, D)
    xh = jnp.broadcast_to(xb, (n_head,) + xb.shape)  # (H, TS, D)

    def proj(w_ref):
        y = jnp.einsum("hld,hdk->hlk", xh, w_ref[...],
                       preferred_element_type=jnp.float32)   # (H, TS, d_head)
        return y.astype(jnp.bfloat16)

    q_ref[0] = proj(wq_ref)
    k_ref[0] = proj(wk_ref)
    v_ref[0] = proj(wv_ref)


def _attn_kernel(q_ref, k_ref, v_ref, x_ref, wfc_ref, g_ref, b_ref, o_ref,
                 *, inv_temp):
    # Scaled dot-product attention over ALL heads at once for one query tile,
    # fused with the fc projection, residual add and LayerNorm.
    q = q_ref[0]                                     # (H, TQ, dk) bf16
    k = k_ref[0]                                     # (H, L,  dk) bf16
    v = v_ref[0]                                     # (H, L,  dv) bf16

    s = jnp.einsum("hqd,hkd->hqk", q, k,
                   preferred_element_type=jnp.float32) * inv_temp   # (H,TQ,L) f32
    s = s - jnp.max(s, axis=-1, keepdims=True)
    e = jnp.exp(s)
    p = e * pl.reciprocal(jnp.sum(e, axis=-1, keepdims=True), approx=True)

    o = jnp.einsum("hqk,hkv->hqv", p.astype(jnp.bfloat16), v,
                   preferred_element_type=jnp.float32)               # (H,TQ,dv)
    fc = jnp.einsum("hqv,hvd->hqd", o.astype(jnp.bfloat16), wfc_ref[...],
                    preferred_element_type=jnp.float32)              # (H,TQ,D)
    fc = jnp.sum(fc, axis=0)                                         # (TQ, D)

    y = _layer_norm(fc + x_ref[0].astype(jnp.float32), g_ref[...], b_ref[...])
    o_ref[0] = y.astype(o_ref.dtype)


def _ffn_kernel(y_ref, w1_ref, b1_ref, w2_ref, b2_ref, g_ref, beta_ref, o_ref):
    # Position-wise FFN: LN(w2(relu(w1(y))) + y). Rows are flattened (B*L).
    y = y_ref[...]                                                   # (TM, D) f32
    h = jnp.dot(y.astype(jnp.bfloat16), w1_ref[...],
                preferred_element_type=jnp.float32) + b1_ref[...]    # (TM, d_inner)
    h = jnp.maximum(h, 0.0)
    f = jnp.dot(h.astype(jnp.bfloat16), w2_ref[...],
                preferred_element_type=jnp.float32) + b2_ref[...]    # (TM, D)
    o_ref[...] = _layer_norm(f + y, g_ref[...], beta_ref[...]).astype(o_ref.dtype)


# ----------------------------------------------------------------------------
# pallas_call wrappers
# ----------------------------------------------------------------------------
def _prenorm(x, pos, gamma, beta, *, scale):
    B, L, D = x.shape
    ts = _pick_tile(L)
    return pl.pallas_call(
        functools.partial(_prenorm_kernel, scale=scale),
        out_shape=jax.ShapeDtypeStruct((B, L, D), jnp.float32),
        grid=(B, L // ts),
        in_specs=[
            pl.BlockSpec((1, ts, D), lambda b, s: (b, s, 0)),
            pl.BlockSpec((ts, D), lambda b, s: (s, 0)),
            _const_spec((1, D)),
            _const_spec((1, D)),
        ],
        out_specs=pl.BlockSpec((1, ts, D), lambda b, s: (b, s, 0)),
        compiler_params=_compiler_params(("parallel", "parallel")),
    )(x, pos, gamma, beta)


def _qkv_proj(x, wq, wk, wv):
    B, L, D = x.shape
    H, _, dk = wq.shape
    dv = wv.shape[2]
    ts = _pick_tile(L)
    return pl.pallas_call(
        _qkv_kernel,
        out_shape=(
            jax.ShapeDtypeStruct((B, H, L, dk), jnp.bfloat16),
            jax.ShapeDtypeStruct((B, H, L, dk), jnp.bfloat16),
            jax.ShapeDtypeStruct((B, H, L, dv), jnp.bfloat16),
        ),
        grid=(B, L // ts),
        in_specs=[
            pl.BlockSpec((1, ts, D), lambda b, s: (b, s, 0)),
            _const_spec((H, D, dk)),
            _const_spec((H, D, dk)),
            _const_spec((H, D, dv)),
        ],
        out_specs=(
            pl.BlockSpec((1, H, ts, dk), lambda b, s: (b, 0, s, 0)),
            pl.BlockSpec((1, H, ts, dk), lambda b, s: (b, 0, s, 0)),
            pl.BlockSpec((1, H, ts, dv), lambda b, s: (b, 0, s, 0)),
        ),
        compiler_params=_compiler_params(("parallel", "parallel")),
    )(x, wq, wk, wv)


def _attention_block(q, k, v, x, wfc, gamma, beta):
    B, H, L, dk = q.shape
    dv = v.shape[3]
    D = x.shape[2]
    tq = _pick_tile(L)
    inv_temp = 1.0 / float(dk ** 0.5)
    return pl.pallas_call(
        functools.partial(_attn_kernel, inv_temp=inv_temp),
        out_shape=jax.ShapeDtypeStruct((B, L, D), jnp.float32),
        grid=(B, L // tq),
        in_specs=[
            pl.BlockSpec((1, H, tq, dk), lambda b, i: (b, 0, i, 0)),   # Q tile
            pl.BlockSpec((1, H, L, dk), lambda b, i: (b, 0, 0, 0)),    # full K
            pl.BlockSpec((1, H, L, dv), lambda b, i: (b, 0, 0, 0)),    # full V
            pl.BlockSpec((1, tq, D), lambda b, i: (b, i, 0)),          # residual
            _const_spec((H, dv, D)),
            _const_spec((1, D)),
            _const_spec((1, D)),
        ],
        out_specs=pl.BlockSpec((1, tq, D), lambda b, i: (b, i, 0)),
        compiler_params=_compiler_params(("parallel", "parallel")),
    )(q, k, v, x, wfc, gamma, beta)


def _ffn_block(y, w1, b1, w2, b2, gamma, beta):
    B, L, D = y.shape
    d_inner = w1.shape[1]
    rows = B * L
    tm = _pick_tile(rows)
    y2 = y.reshape(rows, D)
    out = pl.pallas_call(
        _ffn_kernel,
        out_shape=jax.ShapeDtypeStruct((rows, D), jnp.float32),
        grid=(rows // tm,),
        in_specs=[
            pl.BlockSpec((tm, D), lambda i: (i, 0)),
            _const_spec((D, d_inner)),
            _const_spec((1, d_inner)),
            _const_spec((d_inner, D)),
            _const_spec((1, D)),
            _const_spec((1, D)),
            _const_spec((1, D)),
        ],
        out_specs=pl.BlockSpec((tm, D), lambda i: (i, 0)),
        compiler_params=_compiler_params(("parallel",)),
    )(y2, w1, b1, w2, b2, gamma, beta)
    return out.reshape(B, L, D)


def transformer_encoder(src_seq, params, *, scale_emb=False):
    """Eval-mode TransformerEncoder.forward (return_attns=False).

    src_seq: (B, L, d_model) float32.  Returns enc_output (B, L, d_model) f32.
    """
    # TODO(synk): slf_attn_mask (src_mask) is not implemented; CleanUNet calls
    # the encoder with src_mask=None.
    B, L, D = src_seq.shape
    scale = float(D ** 0.5) if scale_emb else 1.0
    pos = params["pos_table"][:L]

    h = _prenorm(src_seq, pos, params["ln_g"], params["ln_b"], scale=scale)
    for lp in params["layers"]:
        q, k, v = _qkv_proj(h, lp["wq"], lp["wk"], lp["wv"])
        a = _attention_block(q, k, v, h, lp["wfc"], lp["ln1_g"], lp["ln1_b"])
        h = _ffn_block(a, lp["w1"], lp["b1"], lp["w2"], lp["b2"],
                       lp["ln2_g"], lp["ln2_b"])
    return h


# ----------------------------------------------------------------------------
# parameter construction (matches the PyTorch module layout, pre-transposed)
# ----------------------------------------------------------------------------
def _sinusoid_table(n_position, d_hid):
    pos = np.arange(n_position, dtype=np.float64)[:, None]
    j = np.arange(d_hid, dtype=np.float64)[None, :]
    angle = pos / np.power(10000.0, 2.0 * (j // 2) / d_hid)
    table = np.zeros((n_position, d_hid), dtype=np.float32)
    table[:, 0::2] = np.sin(angle[:, 0::2])
    table[:, 1::2] = np.cos(angle[:, 1::2])
    return jnp.asarray(table)


def init_params(key, *, d_model, d_inner, n_head, d_k, d_v, n_layers, n_position):
    layers = []
    scale = 0.1
    for lk in jax.random.split(key, n_layers):
        ks = jax.random.split(lk, 8)
        layers.append({
            # head-major projection weights:  y[h] = x @ W[h]   (H, D, d_head)
            "wq": (scale * jax.random.normal(ks[0], (n_head, d_model, d_k))).astype(jnp.bfloat16),
            "wk": (scale * jax.random.normal(ks[1], (n_head, d_model, d_k))).astype(jnp.bfloat16),
            "wv": (scale * jax.random.normal(ks[2], (n_head, d_model, d_v))).astype(jnp.bfloat16),
            "wfc": (scale * jax.random.normal(ks[3], (n_head, d_v, d_model))).astype(jnp.bfloat16),
            "ln1_g": jnp.ones((1, d_model), jnp.float32),
            "ln1_b": jnp.zeros((1, d_model), jnp.float32),
            "w1": (scale * jax.random.normal(ks[4], (d_model, d_inner))).astype(jnp.bfloat16),
            "b1": (scale * jax.random.normal(ks[5], (1, d_inner))).astype(jnp.float32),
            "w2": (scale * jax.random.normal(ks[6], (d_inner, d_model))).astype(jnp.bfloat16),
            "b2": (scale * jax.random.normal(ks[7], (1, d_model))).astype(jnp.float32),
            "ln2_g": jnp.ones((1, d_model), jnp.float32),
            "ln2_b": jnp.zeros((1, d_model), jnp.float32),
        })
    return {
        "pos_table": _sinusoid_table(n_position, d_model),
        "ln_g": jnp.ones((1, d_model), jnp.float32),   # input LayerNorm (pre-stack)
        "ln_b": jnp.zeros((1, d_model), jnp.float32),
        "layers": layers,
    }


if __name__ == "__main__":
    # Small shapes consistent with the module: batch=2, seq=8, d_model=32,
    # n_head=2, d_k=d_v=16, d_inner=64, n_layers=2.
    B, L = 2, 8
    d_model, d_inner = 32, 64
    n_head, d_k, d_v = 2, 16, 16
    n_layers, n_position = 2, 16

    key = jax.random.PRNGKey(0)
    k_x, k_p = jax.random.split(key)
    x = jax.random.normal(k_x, (B, L, d_model), jnp.float32)
    params = init_params(k_p, d_model=d_model, d_inner=d_inner, n_head=n_head,
                         d_k=d_k, d_v=d_v, n_layers=n_layers,
                         n_position=n_position)

    out = transformer_encoder(x, params)
    out = jax.block_until_ready(out)

    assert out.shape == (B, L, d_model)
    assert bool(jnp.all(jnp.isfinite(out)))
    print("KERNEL_OK")
</pallas_src>

<mosaic_0001>
module attributes {stable_mosaic.version = 11 : i64} {
  func.func @_probe_kernel(%arg0: i32, %arg1: memref<8x128xf32, #tpu.memory_space<vmem>>, %arg2: memref<8x128xf32, #tpu.memory_space<vmem>>) attributes {dimension_semantics = [#tpu.dimension_semantics<arbitrary>], iteration_bounds = array<i64: 1>, scalar_prefetch = 0 : i64, scratch_operands = 0 : i64, tpu.core_type = #tpu.core_type<tc>, window_params = [{pipeline_mode = #tpu.pipeline_mode<synchronous>, transform_indices = @transform_0, window_bounds = array<i64: 8, 128>}, {pipeline_mode = #tpu.pipeline_mode<synchronous>, transform_indices = @transform_1, window_bounds = array<i64: 8, 128>}]} {
    %c0 = arith.constant 0 : index
    %c0_0 = arith.constant 0 : index
    %0 = vector.load %arg1[%c0, %c0_0] : memref<8x128xf32, #tpu.memory_space<vmem>>, vector<8x128xf32>
    %c0_1 = arith.constant 0 : index
    %c0_2 = arith.constant 0 : index
    %1 = vector.load %arg2[%c0_1, %c0_2] : memref<8x128xf32, #tpu.memory_space<vmem>>, vector<8x128xf32>
    tpu.vector_store %arg2[%c0_1, %c0_2], %0 {strides = array<i32>} : memref<8x128xf32, #tpu.memory_space<vmem>>, vector<8x128xf32>,
    return
  }
  func.func @transform_0(%arg0: i32) -> (i32, i32) {
    %c0_i32 = arith.constant 0 : i32
    %c0_i32_0 = arith.constant 0 : i32
    %c0_i32_1 = arith.constant 0 : i32
    return %c0_i32, %c0_i32_0 : i32, i32
  }
  func.func @transform_1(%arg0: i32) -> (i32, i32) {
    %c0_i32 = arith.constant 0 : i32
    %c0_i32_0 = arith.constant 0 : i32
    %c0_i32_1 = arith.constant 0 : i32
    return %c0_i32, %c0_i32_0 : i32, i32
  }
}

module attributes {stable_mosaic.version = 11 : i64} {
  func.func @_prenorm_kernel(%arg0: i32, %arg1: i32, %arg2: memref<1x8x32xf32, #tpu.memory_space<vmem>>, %arg3: memref<8x32xf32, #tpu.memory_space<vmem>>, %arg4: memref<1x32xf32, #tpu.memory_space<vmem>>, %arg5: memref<1x32xf32, #tpu.memory_space<vmem>>, %arg6: memref<1x8x32xf32, #tpu.memory_space<vmem>>) attributes {dimension_semantics = [#tpu.dimension_semantics<parallel>, #tpu.dimension_semantics<parallel>], iteration_bounds = array<i64: 2, 1>, scalar_prefetch = 0 : i64, scratch_operands = 0 : i64, tpu.core_type = #tpu.core_type<tc>, window_params = [{transform_indices = @transform_0, window_bounds = array<i64: 1, 8, 32>}, {transform_indices = @transform_1, window_bounds = array<i64: 8, 32>}, {pipeline_mode = #tpu.pipeline_mode<synchronous>, transform_indices = @transform_2, window_bounds = array<i64: 1, 32>}, {pipeline_mode = #tpu.pipeline_mode<synchronous>, transform_indices = @transform_3, window_bounds = array<i64: 1, 32>}, {transform_indices = @transform_4, window_bounds = array<i64: 1, 8, 32>}]} {
    %c0 = arith.constant 0 : index
    %c0_0 = arith.constant 0 : index
    %c0_1 = arith.constant 0 : index
    %0 = vector.load %arg2[%c0, %c0_0, %c0_1] : memref<1x8x32xf32, #tpu.memory_space<vmem>>, vector<1x8x32xf32>
    %1 = vector.shape_cast %0 : vector<1x8x32xf32> to vector<8x32xf32>
    %c0_2 = arith.constant 0 : index
    %c0_3 = arith.constant 0 : index
    %2 = vector.load %arg3[%c0_2, %c0_3] : memref<8x32xf32, #tpu.memory_space<vmem>>, vector<8x32xf32>
    %3 = arith.addf %1, %2 : vector<8x32xf32>
    %c0_4 = arith.constant 0 : index
    %c0_5 = arith.constant 0 : index
    %4 = vector.load %arg4[%c0_4, %c0_5] : memref<1x32xf32, #tpu.memory_space<vmem>>, vector<1x32xf32>
    %c0_6 = arith.constant 0 : index
    %c0_7 = arith.constant 0 : index
    %5 = vector.load %arg5[%c0_6, %c0_7] : memref<1x32xf32, #tpu.memory_space<vmem>>, vector<1x32xf32>
    %cst = arith.constant dense<0.000000e+00> : vector<8xf32>
    %6 = vector.multi_reduction <add>, %3, %cst [1] : vector<8x32xf32> to vector<8xf32>
    %7 = vector.shape_cast %6 : vector<8xf32> to vector<8x1xf32>
    %cst_8 = arith.constant 3.200000e+01 : f32
    %8 = vector.broadcast %cst_8 : f32 to vector<8x1xf32>
    %9 = arith.divf %7, %8 : vector<8x1xf32>
    %10 = vector.broadcast %9 : vector<8x1xf32> to vector<8x32xf32>
    %11 = arith.subf %3, %10 : vector<8x32xf32>
    %12 = arith.mulf %11, %11 : vector<8x32xf32>
    %cst_9 = arith.constant dense<0.000000e+00> : vector<8xf32>
    %13 = vector.multi_reduction <add>, %12, %cst_9 [1] : vector<8x32xf32> to vector<8xf32>
    %14 = vector.shape_cast %13 : vector<8xf32> to vector<8x1xf32>
    %cst_10 = arith.constant 3.200000e+01 : f32
    %15 = vector.broadcast %cst_10 : f32 to vector<8x1xf32>
    %16 = arith.divf %14, %15 : vector<8x1xf32>
    %17 = vector.broadcast %9 : vector<8x1xf32> to vector<8x32xf32>
    %18 = arith.subf %3, %17 : vector<8x32xf32>
    %cst_11 = arith.constant 9.99999997E-7 : f32
    %19 = vector.broadcast %cst_11 : f32 to vector<8x1xf32>
    %20 = arith.addf %16, %19 : vector<8x1xf32>
    %21 = math.rsqrt %20 : vector<8x1xf32>
    %22 = vector.broadcast %21 : vector<8x1xf32> to vector<8x32xf32>
    %23 = arith.mulf %18, %22 : vector<8x32xf32>
    %24 = vector.broadcast %4 : vector<1x32xf32> to vector<8x32xf32>
    %25 = arith.mulf %23, %24 : vector<8x32xf32>
    %26 = vector.broadcast %5 : vector<1x32xf32> to vector<8x32xf32>
    %27 = arith.addf %25, %26 : vector<8x32xf32>
    %c0_12 = arith.constant 0 : index
    %c0_13 = arith.constant 0 : index
    %c0_14 = arith.constant 0 : index
    %28 = vector.load %arg6[%c0_12, %c0_13, %c0_14] : memref<1x8x32xf32, #tpu.memory_space<vmem>>, vector<1x8x32xf32>
    %29 = vector.shape_cast %28 : vector<1x8x32xf32> to vector<8x32xf32>
    %30 = vector.shape_cast %27 : vector<8x32xf32> to vector<1x8x32xf32>
    tpu.vector_store %arg6[%c0_12, %c0_13, %c0_14], %30 {strides = array<i32>} : memref<1x8x32xf32, #tpu.memory_space<vmem>>, vector<1x8x32xf32>,
    return
  }
  func.func @transform_0(%arg0: i32, %arg1: i32) -> (i32, i32, i32) {
    %c0_i32 = arith.constant 0 : i32
    %c0_i32_0 = arith.constant 0 : i32
    return %arg0, %arg1, %c0_i32 : i32, i32, i32
  }
  func.func @transform_1(%arg0: i32, %arg1: i32) -> (i32, i32) {
    %c0_i32 = arith.constant 0 : i32
    %c0_i32_0 = arith.constant 0 : i32
    return %arg1, %c0_i32 : i32, i32
  }
  func.func @transform_2(%arg0: i32, %arg1: i32) -> (i32, i32) {
    %c0_i32 = arith.constant 0 : i32
    %c0_i32_0 = arith.constant 0 : i32
    %c0_i32_1 = arith.constant 0 : i32
    return %c0_i32, %c0_i32_0 : i32, i32
  }
  func.func @transform_3(%arg0: i32, %arg1: i32) -> (i32, i32) {
    %c0_i32 = arith.constant 0 : i32
    %c0_i32_0 = arith.constant 0 : i32
    %c0_i32_1 = arith.constant 0 : i32
    return %c0_i32, %c0_i32_0 : i32, i32
  }
  func.func @transform_4(%arg0: i32, %arg1: i32) -> (i32, i32, i32) {
    %c0_i32 = arith.constant 0 : i32
    %c0_i32_0 = arith.constant 0 : i32
    return %arg0, %arg1, %c0_i32 : i32, i32, i32
  }
}

</mosaic_0001>

<llo_original>
// kernel: tpu_custom_call.1
$region0: #{tpu_custom_call.1}
  #allocation0 [shape = 'u32[]', space=smem, size = 0x4, offset = 0x4, fixed_abs, tag = 'smem constant byte address 0x4 - core index']
  #allocation1 [shape = 'u32[72,128]{1,0:T(1,128)}', space=vmem, size = 0x9000, scoped, tag = 'internal scratch']
  %s0 = inlined_call_operand.hbm [shape: f32[8,128], index: 0, kind: input, shape index: {}]
  %s1 = inlined_call_operand.hbm [shape: f32[8,128], index: 1, kind: output, shape index: {}]
  %s2 = sld [smem:[#allocation0]]
  $region18: #{tpu_custom_call.1} parent=0
    _
  %s4 = ssub.s32 1, %s2
  %s5 = scalar_select 0, %s4, %s2
  $region1: #{tpu_custom_call.1} parent=0
    #allocation2 [shape = 'u8[4096]{0}', space=vmem, size = 0x1000, scoped, tag = 'input window, operand 0, single buffered']
    #allocation3 [shape = 's32[1]{0}', space=sflag, size = 0x4, scoped, tag = 'scoped memory for tpu_custom_call.1']
    #allocation4 [shape = 's32[1]{0}', space=sflag, size = 0x4, scoped, tag = 'scoped memory for tpu_custom_call.1']
    #allocation5 [shape = 'u8[4096]{0}', space=vmem, size = 0x1000, scoped, tag = 'output window, operand 0, single buffered']
    %6 = vsyncpa [#allocation3], 0
    %7 = vsyncpa [#allocation4], 0
    // Predicated region
    $region2: #{tpu_custom_call.1} parent=1 // pred_check
      _
    $region3: #{tpu_custom_call.1} parent=1 // pred_check_branch
      %9 = sbr.rel (0) target = $region5
    $region4: #{tpu_custom_call.1} parent=1 // pred_region
      %11 = vsyncadd [#allocation3], 0
      %s13 = sshll.u32 %s0, 4
      %s14 = int_to_ptr.hbm [resolvable:$true] %s13
      %s15 = sshll.u32 [#allocation2], 4
      %s16 = int_to_ptr.vmem [resolvable:$true] %s15
      %18 = dma.hbm_to_vmem [thread:$0]  %s14, 128, %s16, [#allocation3]
    $region5: #{tpu_custom_call.1} parent=1 // pred_fallthru
      _
    // Predicated region
    $region6: #{tpu_custom_call.1} parent=1 // pred_check
      _
    $region7: #{tpu_custom_call.1} parent=1 // pred_check_branch
      %20 = sbr.rel (0) target = $region9
    $region8: #{tpu_custom_call.1} parent=1 // pred_region
      %22 = dma.done [#allocation3], 128
    $region9: #{tpu_custom_call.1} parent=1 // pred_fallthru
      _
    %v23 = vld [vmem:[#allocation2] sm:$0xff]
    %24 = vst [vmem:[#allocation5] sm:$0xff] %v23
    // Predicated region
    $region10: #{tpu_custom_call.1} parent=1 // pred_check
      _
    $region11: #{tpu_custom_call.1} parent=1 // pred_check_branch
      %26 = sbr.rel (0) target = $region13
    $region12: #{tpu_custom_call.1} parent=1 // pred_region
      %28 = vsyncadd [#allocation4], 0
      %s30 = sshll.u32 [#allocation5], 4
      %s31 = int_to_ptr.vmem [resolvable:$true] %s30
      %s32 = sshll.u32 %s1, 4
      %s33 = int_to_ptr.hbm [resolvable:$true] %s32
      %35 = dma.vmem_to_hbm [thread:$0]  %s31, 128, %s33, [#allocation4]
    $region13: #{tpu_custom_call.1} parent=1 // pred_fallthru
      _
    // Predicated region
    $region14: #{tpu_custom_call.1} parent=1 // pred_check
      _
    $region15: #{tpu_custom_call.1} parent=1 // pred_check_branch
      %37 = sbr.rel (0) target = $region17
    $region16: #{tpu_custom_call.1} parent=1 // pred_region
      %39 = dma.done [#allocation4], 128
    $region17: #{tpu_custom_call.1} parent=1 // pred_fallthru
      _
    %40 = vsyncpa [#allocation3], 1
    %41 = vsyncpa [#allocation4], 1

// kernel: tpu_custom_call.1
$region0: #{tpu_custom_call.1}
  #allocation0 [shape = 'u32[]', space=smem, size = 0x4, offset = 0x4, fixed_abs, tag = 'smem constant byte address 0x4 - core index']
  #allocation1 [shape = 'u32[72,128]{1,0:T(1,128)}', space=vmem, size = 0x9000, scoped, tag = 'internal scratch']
  %s0 = inlined_call_operand.hbm [shape: f32[2,8,32], index: 0, kind: input, shape index: {}]
  %s1 = inlined_call_operand.hbm [shape: f32[8,32], index: 1, kind: input, shape index: {}]
  %s2 = inlined_call_operand.vmem [shape: f32[1,32], index: 2, kind: input, shape index: {}]
  %s3 = inlined_call_operand.vmem [shape: f32[1,32], index: 3, kind: input, shape index: {}]
  %s4 = inlined_call_operand.hbm [shape: f32[2,8,32], index: 4, kind: output, shape index: {}]
  %s5 = sld [smem:[#allocation0]]
  $region57: #{tpu_custom_call.1} parent=0
    _
  %s7 = ssub.s32 1, %s5
  %s8 = scalar_select 0, %s7, %s5
  $region1: #{tpu_custom_call.1} parent=0
    #allocation2 [shape = 'u8[8192]{0}', space=vmem, size = 0x2000, scoped, tag = 'input window, operand 0']
    #allocation3 [shape = 's32[2]{0}', space=sflag, size = 0x8, scoped, tag = 'scoped memory for tpu_custom_call.1']
    #allocation4 [shape = 's32[2]{0}', space=sflag, size = 0x8, scoped, tag = 'scoped memory for tpu_custom_call.1']
    #allocation5 [shape = 'u8[4096]{0}', space=vmem, size = 0x1000, scoped, tag = 'input window, operand 1, single buffered']
    #allocation6 [shape = 's32[1]{0}', space=sflag, size = 0x4, scoped, tag = 'scoped memory for tpu_custom_call.1']
    #allocation7 [shape = 'u8[8192]{0}', space=vmem, size = 0x2000, scoped, tag = 'output window, operand 0']
    %9 = vsyncpa [#allocation3], 0
    %s10 = scalar_lea.sflag [#allocation3], 1
    %11 = vsyncpa %s10, 0
    %12 = vsyncpa [#allocation6], 0
    %13 = vsyncpa [#allocation4], 0
    %s14 = scalar_lea.sflag [#allocation4], 1
    %15 = vsyncpa %s14, 0
    loop: start=0, step=1, limit=4
    $region2: #{tpu_custom_call.1} parent=1 // loop_pre_header
      _
    $region3: #{tpu_custom_call.1} parent=1 // loop_header
      %s17 = sphi 0, %s21
      %p18 = scmp.ge.s32.totalorder %s17, 4
      %s24 = sphi 0, %s36
      %s25 = sphi 0, %s32
      %s26 = sphi 0, %s24
      %s27 = sphi 0, %s25
      %s28 = sphi 0, %s26
      %s29 = sphi 0, %s27
      %s41 = sphi 0, %s43
      %s44 = sphi 0, %s41
      %s45 = sphi 0, %s44
      %s61 = sphi 0, %s45
      %s67 = sphi 0, %s69
      %s70 = sphi 0, %s67
      %s71 = sphi 0, %s70
      %s87 = sphi 0, %s71
      %s91 = sphi 0, %s91
      %s93 = sphi 0, %s91
      %s94 = sphi 0, %s93
      %s108 = sphi 0, %s94
      %s112 = sphi 0, %s112
      %s114 = sphi 0, %s112
      %s115 = sphi 0, %s114
      %s129 = sphi 0, %s115
      %s137 = sphi 0, %s139
      %s140 = sphi 0, %s137
      %s141 = sphi 0, %s140
      %s157 = sphi 0, %s141
    $region4: #{tpu_custom_call.1} parent=1 // loop_header_branch
      %20 = sbr.rel (%p18) target = $region8
    $region5: #{tpu_custom_call.1} parent=1 // loop_body
      %s22 = ssub.s32 %s17, 1
      %s23 = ssub.s32 %s17, 2
      %s30 = sadd.s32 1, %s25
      %p31 = scmp.ge.s32.totalorder %s30, 1
      %s32 = scalar_select %p31, 0, %s30
      %s33 = sadd.s32 1, %s24
      %s34 = scalar_select %p31, %s33, %s24
      %p35 = scmp.ge.s32.totalorder %s34, 2
      %s36 = scalar_select %p35, 0, %s34
      %s37 = ssub.s32 %s24, %s36
      %s38 = ssub.s32 %s25, %s32
      %s39 = sor.u32 %s37, %s38
      %p40 = scmp.eq.s32.totalorder %s39, 0
      %s42 = sadd.s32 %s41, 1
      %s43 = scalar_select %p40, %s41, %s42
      %p46 = pneg %p40
      %p47 = scmp.eq.s32.totalorder %s17, 1
      %p48 = por %p46, %p47
      %p49 = scmp.ne.s32.totalorder %s41, %s44
      %p50 = scmp.eq.s32.totalorder %s17, 0
      %p51 = por %p49, %p50
      %p52 = scmp.ne.s32.totalorder %s41, %s44
      %p53 = scmp.eq.s32.totalorder %s22, 1
      %p54 = por %p52, %p53
      %p55 = scmp.ne.s32.totalorder %s44, %s45
      %p56 = scmp.eq.s32.totalorder %s22, 0
      %p57 = por %p55, %p56
      %p58 = scmp.ne.s32.totalorder %s44, %s45
      %p59 = scmp.eq.s32.totalorder %s23, 1
      %p60 = por %p58, %p59
      %p62 = scmp.ne.s32.totalorder %s45, %s61
      %p63 = scmp.eq.s32.totalorder %s23, 0
      %p64 = por %p62, %p63
      %s65 = ssub.s32 %s25, %s32
      %p66 = scmp.eq.s32.totalorder %s65, 0
      %s68 = sadd.s32 %s67, 1
      %s69 = scalar_select %p66, %s67, %s68
      %p72 = pneg %p66
      %p73 = scmp.eq.s32.totalorder %s17, 1
      %p74 = por %p72, %p73
      %p75 = scmp.ne.s32.totalorder %s67, %s70
      %p76 = scmp.eq.s32.totalorder %s17, 0
      %p77 = por %p75, %p76
      %p78 = scmp.ne.s32.totalorder %s67, %s70
      %p79 = scmp.eq.s32.totalorder %s22, 1
      %p80 = por %p78, %p79
      %p81 = scmp.ne.s32.totalorder %s70, %s71
      %p82 = scmp.eq.s32.totalorder %s22, 0
      %p83 = por %p81, %p82
      %p84 = scmp.ne.s32.totalorder %s70, %s71
      %p85 = scmp.eq.s32.totalorder %s23, 1
      %p86 = por %p84, %p85
      %p88 = scmp.ne.s32.totalorder %s71, %s87
      %p89 = scmp.eq.s32.totalorder %s23, 0
      %p90 = por %p88, %p89
      %s92 = sadd.s32 %s91, 1
      %p95 = scmp.eq.s32.totalorder %s17, 1
      %p96 = scmp.ne.s32.totalorder %s91, %s93
      %p97 = scmp.eq.s32.totalorder %s17, 0
      %p98 = por %p96, %p97
      %p99 = scmp.ne.s32.totalorder %s91, %s93
      %p100 = scmp.eq.s32.totalorder %s22, 1
      %p101 = por %p99, %p100
      %p102 = scmp.ne.s32.totalorder %s93, %s94
      %p103 = scmp.eq.s32.totalorder %s22, 0
      %p104 = por %p102, %p103
      %p105 = scmp.ne.s32.totalorder %s93, %s94
      %p106 = scmp.eq.s32.totalorder %s23, 1
      %p107 = por %p105, %p106
      %p109 = scmp.ne.s32.totalorder %s94, %s108
      %p110 = scmp.eq.s32.totalorder %s23, 0
      %p111 = por %p109, %p110
      %s113 = sadd.s32 %s112, 1
      %p116 = scmp.eq.s32.totalorder %s17, 1
      %p117 = scmp.ne.s32.totalorder %s112, %s114
      %p118 = scmp.eq.s32.totalorder %s17, 0
      %p119 = por %p117, %p118
      %p120 = scmp.ne.s32.totalorder %s112, %s114
      %p121 = scmp.eq.s32.totalorder %s22, 1
      %p122 = por %p120, %p121
      %p123 = scmp.ne.s32.totalorder %s114, %s115
      %p124 = scmp.eq.s32.totalorder %s22, 0
      %p125 = por %p123, %p124
      %p126 = scmp.ne.s32.totalorder %s114, %s115
      %p127 = scmp.eq.s32.totalorder %s23, 1
      %p128 = por %p126, %p127
      %p130 = scmp.ne.s32.totalorder %s115, %s129
      %p131 = scmp.eq.s32.totalorder %s23, 0
      %p132 = por %p130, %p131
      %s133 = ssub.s32 %s24, %s36
      %s134 = ssub.s32 %s25, %s32
      %s135 = sor.u32 %s133, %s134
      %p136 = scmp.eq.s32.totalorder %s135, 0
      %s138 = sadd.s32 %s137, 1
      %s139 = scalar_select %p136, %s137, %s138
      %p142 = pneg %p136
      %p143 = scmp.eq.s32.totalorder %s17, 1
      %p144 = por %p142, %p143
      %p145 = scmp.ne.s32.totalorder %s137, %s140
      %p146 = scmp.eq.s32.totalorder %s17, 0
      %p147 = por %p145, %p146
      %p148 = scmp.ne.s32.totalorder %s137, %s140
      %p149 = scmp.eq.s32.totalorder %s22, 1
      %p150 = por %p148, %p149
      %p151 = scmp.ne.s32.totalorder %s140, %s141
      %p152 = scmp.eq.s32.totalorder %s22, 0
      %p153 = por %p151, %p152
      %p154 = scmp.ne.s32.totalorder %s140, %s141
      %p155 = scmp.eq.s32.totalorder %s23, 1
      %p156 = por %p154, %p155
      %p158 = scmp.ne.s32.totalorder %s141, %s157
      %p159 = scmp.eq.s32.totalorder %s23, 0
      %p160 = por %p158, %p159
      %p161 = scmp.le.s32.totalorder 1, %s17
      %p162 = scmp.lt.s32.totalorder %s17, 3
      %p163 = pnand %p161, %p162
      %p164 = pneg %p163
      // Predicated region
      $region9: #{tpu_custom_call.1} parent=5 // pred_check
        _
      $region10: #{tpu_custom_call.1} parent=5 // pred_check_branch
        %166 = sbr.rel (%p163) target = $region12
      $region11: #{tpu_custom_call.1} parent=5 // pred_region
        %s167 = ssub.s32 %s17, 1
        // Predicated region
        $region13: #{tpu_custom_call.1} parent=11 // pred_check
          %p168 = pneg %p83
        $region14: #{tpu_custom_call.1} parent=11 // pred_check_branch
          %170 = sbr.rel (%p168) target = $region16
        $region15: #{tpu_custom_call.1} parent=11 // pred_region
          %172 = vsyncadd [#allocation6], 0
          %s173 = smul.addr %s27, 8
          %s174 = scalar_lea.hbm %s1, %s173
          %s176 = sshll.u32 %s174, 4
          %s177 = int_to_ptr.hbm [resolvable:$true] %s176
          %s178 = sshll.u32 [#allocation5], 4
          %s179 = int_to_ptr.vmem [resolvable:$true] %s178
          %181 = dma.hbm_to_vmem [thread:$0]  %s177, 128, %s179, [#allocation6]
        $region16: #{tpu_custom_call.1} parent=11 // pred_fallthru
          _
        // Predicated region
        $region17: #{tpu_custom_call.1} parent=11 // pred_check
          %p182 = pneg %p104
        $region18: #{tpu_custom_call.1} parent=11 // pred_check_branch
          %184 = sbr.rel (%p182) target = $region20
        $region19: #{tpu_custom_call.1} parent=11 // pred_region
          _
        $region20: #{tpu_custom_call.1} parent=11 // pred_fallthru
          _
        // Predicated region
        $region21: #{tpu_custom_call.1} parent=11 // pred_check
          %p185 = pneg %p125
        $region22: #{tpu_custom_call.1} parent=11 // pred_check_branch
          %187 = sbr.rel (%p185) target = $region24
        $region23: #{tpu_custom_call.1} parent=11 // pred_region
          _
        $region24: #{tpu_custom_call.1} parent=11 // pred_fallthru
          _
      $region12: #{tpu_custom_call.1} parent=5 // pred_fallthru
        _
      %p188 = scmp.lt.s32.totalorder %s17, 2
      // Predicated region
      $region25: #{tpu_custom_call.1} parent=5 // pred_check
        %p189 = pneg %p188
      $region26: #{tpu_custom_call.1} parent=5 // pred_check_branch
        %191 = sbr.rel (%p189) target = $region28
      $region27: #{tpu_custom_call.1} parent=5 // pred_region
        // Predicated region
        $region29: #{tpu_custom_call.1} parent=27 // pred_check
          %p192 = pneg %p51
        $region30: #{tpu_custom_call.1} parent=27 // pred_check_branch
          %194 = sbr.rel (%p192) target = $region32
        $region31: #{tpu_custom_call.1} parent=27 // pred_region
          %s195 = sand.u32 %s41, 1
          %s196 = scalar_lea.sflag [#allocation3], %s195
          %s197 = sand.u32 %s41, 1
          %s198 = smul.addr %s197, 8
          %s199 = scalar_lea.vmem [#allocation2], %s198
          %201 = vsyncadd %s196, 0
          %s202 = sadd.s32 %s25, %s24
          %s203 = smul.addr %s202, 8
          %s204 = scalar_lea.hbm %s0, %s203
          %s206 = sshll.u32 %s204, 4
          %s207 = int_to_ptr.hbm [resolvable:$true] %s206
          %s208 = sshll.u32 %s199, 4
          %s209 = int_to_ptr.vmem [resolvable:$true] %s208
          %211 = dma.hbm_to_vmem [thread:$0]  %s207, 128, %s209, %s196
        $region32: #{tpu_custom_call.1} parent=27 // pred_fallthru
          _
      $region28: #{tpu_custom_call.1} parent=5 // pred_fallthru
        _
      %p212 = scmp.le.s32.totalorder 1, %s17
      %p213 = scmp.lt.s32.totalorder %s17, 3
      %p214 = pnand %p212, %p213
      %p215 = pneg %p214
      // Predicated region
      $region33: #{tpu_custom_call.1} parent=5 // pred_check
        _
      $region34: #{tpu_custom_call.1} parent=5 // pred_check_branch
        %217 = sbr.rel (%p214) target = $region36
      $region35: #{tpu_custom_call.1} parent=5 // pred_region
        %s218 = ssub.s32 %s17, 1
        %s219 = sand.u32 %s44, 1
        %s220 = scalar_lea.sflag [#allocation3], %s219
        %s221 = sand.u32 %s44, 1
        %s222 = smul.addr %s221, 8
        %s223 = scalar_lea.vmem [#allocation2], %s222
        // Predicated region
        $region37: #{tpu_custom_call.1} parent=35 // pred_check
          %p224 = pneg %p57
        $region38: #{tpu_custom_call.1} parent=35 // pred_check_branch
          %226 = sbr.rel (%p224) target = $region40
        $region39: #{tpu_custom_call.1} parent=35 // pred_region
          %228 = dma.done %s220, 128
        $region40: #{tpu_custom_call.1} parent=35 // pred_fallthru
          _
        // Predicated region
        $region41: #{tpu_custom_call.1} parent=35 // pred_check
          %p229 = pneg %p83
        $region42: #{tpu_custom_call.1} parent=35 // pred_check_branch
          %231 = sbr.rel (%p229) target = $region44
        $region43: #{tpu_custom_call.1} parent=35 // pred_region
          %233 = dma.done [#allocation6], 128
        $region44: #{tpu_custom_call.1} parent=35 // pred_fallthru
          _
        %s234 = sand.u32 %s44, 1
        %s235 = scalar_lea.sflag [#allocation3], %s234
        %s236 = sand.u32 %s44, 1
        %s237 = smul.addr %s236, 8
        %s238 = scalar_lea.vmem [#allocation2], %s237
        %p239 = pneg %p57
        %p240 = pneg %p54
        %p241 = pneg %p83
        %p242 = pneg %p80
        %p243 = pneg %p104
        %p244 = pneg %p101
        %p245 = pneg %p125
        %p246 = pneg %p122
        %p247 = pneg %p153
        %p248 = pneg %p150
        %s249 = sand.u32 %s140, 1
        %s250 = scalar_lea.sflag [#allocation4], %s249
        %s251 = sand.u32 %s140, 1
        %s252 = smul.addr %s251, 8
        %s253 = scalar_lea.vmem [#allocation7], %s252
        %v254 = vld [vmem:[%s223] sm:$0xff]
        %v255 = vld [vmem:[#allocation5] sm:$0xff]
        %v256 = vadd.f32 %v254, %v255
        %v257 = vld [vmem:[%s2] sm:$0x1]
        %v258 = vld [vmem:[%s3] sm:$0x1]
        %vm259 = vcmask 261120
        %v260 = vsel %vm259, %v256, 0.0
        %261 = vadd.xlane.f32.xlu0 %v260
        %v262 = vpop.xlane.xlu0 %261
        %v263 = vrcp.pop 32.0
        %v264 = vmul.f32 32.0, %v263
        %v265 = vsub.f32 1.0, %v264
        %v266 = vmul.f32 %v263, %v265
        %v267 = vadd.f32 %v263, %v266
        %vm268 = vweird.f32 %v263
        %v269 = vsel %vm268, %v263, %v267
        %v270 = vmul.f32 %v262, %v269
        %v271 = vsub.f32 %v256, %v270
        %v272 = vmul.f32 %v271, %v271
        %v273 = vsel %vm259, %v272, 0.0
        %274 = vadd.xlane.f32.xlu0 %v273
        %v275 = vpop.xlane.xlu0 %274
        %v276 = vmul.f32 %v275, %v269
        %v277 = vadd.f32 %v276, 1e-06
        %v278 = vrsqrt.pop %v277
        %v279 = vmul.f32 %v278, %v277
        %v280 = vmul.f32 %v279, %v278
        %v281 = vmul.f32 0.5, %v280
        %v282 = vsub.f32 1.5, %v281
        %v283 = vmul.f32 %v278, %v282
        %vm284 = vweird.f32 %v277
        %vm285 = vweird.f32 %v278
        %vm286 = vmor %vm284, %vm285
        %v287 = vsel %vm286, %v278, %v283
        %v288 = vmul.f32 %v271, %v287
        %v290 = vperm.slane %v257, 0
        %v292 = vmul.f32 %v288, %v290
        %v294 = vperm.slane %v258, 0
        %v296 = vadd.f32 %v292, %v294
        %297 = vst.msk [vmem:[%s253] sm:$0xff] %vm259, %v296
        %s298 = sand.u32 %s140, 1
        %s299 = scalar_lea.sflag [#allocation4], %s298
        %s300 = sand.u32 %s140, 1
        %s301 = smul.addr %s300, 8
        %s302 = scalar_lea.vmem [#allocation7], %s301
        // Predicated region
        $region45: #{tpu_custom_call.1} parent=35 // pred_check
          %p303 = pneg %p150
        $region46: #{tpu_custom_call.1} parent=35 // pred_check_branch
          %305 = sbr.rel (%p303) target = $region48
        $region47: #{tpu_custom_call.1} parent=35 // pred_region
          %307 = vsyncadd %s299, 0
          %s308 = sadd.s32 %s27, %s26
          %s309 = smul.addr %s308, 8
          %s310 = scalar_lea.hbm %s4, %s309
          %s312 = sshll.u32 %s302, 4
          %s313 = int_to_ptr.vmem [resolvable:$true] %s312
          %s314 = sshll.u32 %s310, 4
          %s315 = int_to_ptr.hbm [resolvable:$true] %s314
          %317 = dma.vmem_to_hbm [thread:$0]  %s313, 128, %s315, %s299
        $region48: #{tpu_custom_call.1} parent=35 // pred_fallthru
          _
      $region36: #{tpu_custom_call.1} parent=5 // pred_fallthru
        _
      %p318 = scmp.le.s32.totalorder 2, %s17
      // Predicated region
      $region49: #{tpu_custom_call.1} parent=5 // pred_check
        %p319 = pneg %p318
      $region50: #{tpu_custom_call.1} parent=5 // pred_check_branch
        %321 = sbr.rel (%p319) target = $region52
      $region51: #{tpu_custom_call.1} parent=5 // pred_region
        %s322 = ssub.s32 %s17, 2
        // Predicated region
        $region53: #{tpu_custom_call.1} parent=51 // pred_check
          %p323 = pneg %p156
        $region54: #{tpu_custom_call.1} parent=51 // pred_check_branch
          %325 = sbr.rel (%p323) target = $region56
        $region55: #{tpu_custom_call.1} parent=51 // pred_region
          %s326 = sand.u32 %s141, 1
          %s327 = scalar_lea.sflag [#allocation4], %s326
          %s328 = sand.u32 %s141, 1
          %s329 = smul.addr %s328, 8
          %s330 = scalar_lea.vmem [#allocation7], %s329
          %332 = dma.done %s327, 128
        $region56: #{tpu_custom_call.1} parent=51 // pred_fallthru
          _
      $region52: #{tpu_custom_call.1} parent=5 // pred_fallthru
        _
    $region6: #{tpu_custom_call.1} parent=1 // loop_footer
      %s21 = sadd.s32 1, %s17
    $region7: #{tpu_custom_call.1} parent=1 // loop_footer_branch
      %16 = sbr.rel target = $region3
    $region8: #{tpu_custom_call.1} parent=1 // loop_exit
      _
    %333 = vsyncpa [#allocation3], 1
    %s334 = scalar_lea.sflag [#allocation3], 1
    %335 = vsyncpa %s334, 1
    %336 = vsyncpa [#allocation6], 1
    %337 = vsyncpa [#allocation4], 1
    %s338 = scalar_lea.sflag [#allocation4], 1
    %339 = vsyncpa %s338, 1

</llo_original>
